<compile_context>
chip_gen: v6e
topology: v6e:2x2x1
jax: 0.10.0
libtpu: 0.0.40
codegen_flags: <defaults>
</compile_context>

<pallas_src>
import jax
import jax.numpy as jnp
from jax.experimental import pallas as pl
from jax.experimental.pallas import tpu as pltpu


def _round_up(x, m):
    return (x + m - 1) // m * m


def stft_model_forward(x, learnt_win, w, b, *, bm=None,
                       mxu_dtype=jnp.bfloat16,
                       vmem_limit_bytes=None):
    """Forward pass of STFTModel.

    x:          (B, C, H, W) or (B, inp_len)    -- any float dtype
    learnt_win: (inp_len,)
    w:          (inp_len, hop_len)              -- pre-transposed from PyTorch (out, in)
    b:          (hop_len,)
    returns     (B, hop_len) float32
    """
    B = x.shape[0]
    x2 = x.reshape(B, -1)                      # free (contiguous) reshape, no copy
    K = x2.shape[1]
    N = w.shape[1]
    assert learnt_win.shape == (K,)
    assert w.shape == (K, N) and b.shape == (N,)

    # Fold the sigmoid gate into the small weight once:
    #   sigmoid(win) * x @ W == x @ (sigmoid(win)[:, None] * W)
    w_gated = (jax.nn.sigmoid(learnt_win.astype(jnp.float32))[:, None]
               * w.astype(jnp.float32))

    # ---- generation-aware VMEM sizing --------------------------------------
    try:
        vmem_cap = int(pltpu.get_tpu_info().vmem_capacity_bytes)
    except Exception:
        vmem_cap = 64 * 1024 * 1024            # conservative: v7x per-core VMEM
    if vmem_limit_bytes is None:
        vmem_limit_bytes = min(int(vmem_cap * 0.78), 100 * 1024 * 1024)
    budget = int(vmem_limit_bytes * 0.8)       # leave headroom for Mosaic internals

    w_itemsize = jnp.dtype(mxu_dtype).itemsize
    x_itemsize = jnp.dtype(x2.dtype).itemsize

    N_pad = _round_up(N, 128)

    # ---- K tiling -----------------------------------------------------------
    # Single K tile (tk == full K) when the gated weight fits comfortably:
    # W stays resident across all batch tiles, no K grid axis / accumulator,
    # and no K-tail masking is needed (full-dim block => no OOB columns).
    if 2 * K * N_pad * w_itemsize <= min(budget // 3, 16 * 1024 * 1024):
        num_k, tk = 1, K
    else:
        K_pad128 = _round_up(K, 128)
        num_k = pl.cdiv(K_pad128, 2048)
        tk = _round_up(pl.cdiv(K_pad128, num_k), 128)
        num_k = pl.cdiv(K_pad128, tk)
    K_pad = num_k * tk                          # == K in the single-tile case

    # Pad only the SMALL parameter tensors (never x).
    if K_pad != K or N_pad != N:
        w_gated = jnp.pad(w_gated, ((0, K_pad - K), (0, N_pad - N)))
    wp = w_gated.astype(mxu_dtype)
    bp = b.astype(jnp.float32)
    if N_pad != N:
        bp = jnp.pad(bp, (0, N_pad - N))
    bp = bp.reshape(1, N_pad)

    # ---- batch tile auto-sizing ---------------------------------------------
    if bm is None:
        fixed = 2 * tk * N_pad * w_itemsize + 2 * 8 * N_pad * 4   # W dbl-buf + bias
        bm = 8
        for cand in (4096, 2048, 1024, 512, 256, 128, 64, 32, 16, 8):
            need = (fixed
                    + 2 * cand * tk * x_itemsize    # x tiles (double buffer)
                    + 2 * cand * N_pad * 4)         # out tiles (double buffer)
            if need <= budget:
                bm = cand
                break
    bm = max(8, _round_up(bm, 8))
    if B < 8:
        bm = B                                  # one full-extent batch block
    else:
        bm = min(bm, _round_up(B, 8))
        if B >= 16:
            # keep >= 2 batch tiles so v7x's two TensorCores both get work
            bm = min(bm, _round_up(pl.cdiv(B, 2), 8))

    num_b = pl.cdiv(B, bm)
    needs_k_mask = (num_k > 1) and (K % tk != 0)

    cost = pl.CostEstimate(
        flops=2 * B * K * N_pad,
        transcendentals=B * N_pad,
        bytes_accessed=(B * K * x_itemsize
                        + num_b * K_pad * N_pad * w_itemsize
                        + B * N_pad * 4),
    )

    if num_k == 1:
        # --- fused single-K kernel: pure dot + bias + tanh ---
        def kernel(x_ref, w_ref, b_ref, o_ref):
            acc = jnp.dot(x_ref[...].astype(mxu_dtype), w_ref[...],
                          preferred_element_type=jnp.float32)
            o_ref[...] = jnp.tanh(acc + b_ref[...])

        grid = (num_b,)
        in_specs = [
            pl.BlockSpec((bm, tk), lambda i: (i, 0)),      # x rows (unpadded stream)
            pl.BlockSpec((tk, N_pad), lambda i: (0, 0)),   # gated weight (resident)
            pl.BlockSpec((1, N_pad), lambda i: (0, 0)),    # bias (resident)
        ]
        out_specs = pl.BlockSpec((bm, N_pad), lambda i: (i, 0))
        dim_sem = ("parallel",)
    else:
        # --- K-tiled kernel: accumulate directly into the resident f32 output ---
        def kernel(x_ref, w_ref, b_ref, o_ref):
            k = pl.program_id(1)
            xb = x_ref[...]
            if needs_k_mask:
                # Mask the (possibly garbage) K-tail of the partial edge block.
                col = jax.lax.broadcasted_iota(jnp.int32, xb.shape, 1)
                xb = jnp.where(col < (K - k * tk), xb, 0.0)
            part = jnp.dot(xb.astype(mxu_dtype), w_ref[...],
                           preferred_element_type=jnp.float32)

            @pl.when(k == 0)
            def _():
                # Fold the bias into the accumulator init.
                o_ref[...] = jnp.broadcast_to(b_ref[...], o_ref.shape)

            o_ref[...] += part

            @pl.when(k == pl.num_programs(1) - 1)
            def _():
                o_ref[...] = jnp.tanh(o_ref[...])

        grid = (num_b, num_k)
        in_specs = [
            pl.BlockSpec((bm, tk), lambda i, k: (i, k)),
            pl.BlockSpec((tk, N_pad), lambda i, k: (k, 0)),
            pl.BlockSpec((1, N_pad), lambda i, k: (0, 0)),
        ]
        out_specs = pl.BlockSpec((bm, N_pad), lambda i, k: (i, 0))
        dim_sem = ("parallel", "arbitrary")

    out = pl.pallas_call(
        kernel,
        out_shape=jax.ShapeDtypeStruct((B, N_pad), jnp.float32),
        grid_spec=pltpu.PrefetchScalarGridSpec(
            num_scalar_prefetch=0,
            grid=grid,
            in_specs=in_specs,
            out_specs=out_specs,
        ),
        compiler_params=pltpu.CompilerParams(
            dimension_semantics=dim_sem,
            vmem_limit_bytes=int(vmem_limit_bytes),
        ),
        cost_estimate=cost,
    )(x2, wp, bp)

    return out if N_pad == N else out[:, :N]


def stft_model_reference(x, learnt_win, w, b, mxu_dtype=jnp.float32):
    """Pure-JAX reference.  With mxu_dtype=bfloat16 it mirrors the kernel's
    operand precision (bf16 operands, f32 accumulate / bias / tanh)."""
    B = x.shape[0]
    x2 = x.reshape(B, -1).astype(jnp.float32)
    wg = (jax.nn.sigmoid(learnt_win.astype(jnp.float32))[:, None]
          * w.astype(jnp.float32))
    acc = jnp.dot(x2.astype(mxu_dtype), wg.astype(mxu_dtype),
                  preferred_element_type=jnp.float32)
    return jnp.tanh(acc + b.astype(jnp.float32)[None, :])


if __name__ == "__main__":
    # Small shapes consistent with the module: inp_len = C*H*W.
    # Deliberately non-aligned (B=6, inp_len=252) to exercise the
    # unpadded-x / full-dim-block paths.
    B, C, H, W = 6, 4, 7, 9          # inp_len = 4*7*9 = 252
    inp_len = C * H * W
    hop_length = 128

    key = jax.random.PRNGKey(0)
    kx, kw, kb = jax.random.split(key, 3)

    x = jax.random.normal(kx, (B, C, H, W), dtype=jnp.float32)

    # Parameters (deterministic in-script init).
    # learnt_win is zero-initialized in the PyTorch __init__.
    learnt_win = jnp.zeros((inp_len,), dtype=jnp.float32)
    # nn.Linear default init: U(-1/sqrt(fan_in), 1/sqrt(fan_in)).
    bound = 1.0 / (inp_len ** 0.5)
    w_torch = jax.random.uniform(kw, (hop_length, inp_len),
                                 minval=-bound, maxval=bound,
                                 dtype=jnp.float32)   # PyTorch (out, in)
    b_lin = jax.random.uniform(kb, (hop_length,),
                               minval=-bound, maxval=bound,
                               dtype=jnp.float32)
    w_jax = w_torch.T                                  # (in, out) for kernel

    out = stft_model_forward(x, learnt_win, w_jax, b_lin)   # bf16 MXU operands
    out = jax.block_until_ready(out)
    assert out.shape == (B, hop_length)

    # Tight check against a reference that mirrors the kernel's bf16 operand
    # precision; loose check against the exact f32 math for semantic sanity.
    ref_mxu = stft_model_reference(x, learnt_win, w_jax, b_lin,
                                   mxu_dtype=jnp.bfloat16)
    ref_f32 = stft_model_reference(x, learnt_win, w_jax, b_lin)
    assert jnp.allclose(out, ref_mxu, atol=2e-3, rtol=2e-3), \
        "mismatch vs bf16-mirrored reference"
    assert jnp.allclose(out, ref_f32, atol=5e-2, rtol=5e-2), \
        "mismatch vs f32 reference"

    print("KERNEL_OK")
</pallas_src>

<mosaic_0001>
module attributes {stable_mosaic.version = 11 : i64} {
  func.func @kernel(%arg0: i32, %arg1: memref<6x252xf32, #tpu.memory_space<vmem>>, %arg2: memref<252x128xbf16, #tpu.memory_space<vmem>>, %arg3: memref<1x128xf32, #tpu.memory_space<vmem>>, %arg4: memref<6x128xf32, #tpu.memory_space<vmem>>) attributes {dimension_semantics = [#tpu.dimension_semantics<parallel>], iteration_bounds = array<i64: 1>, scalar_prefetch = 0 : i64, scratch_operands = 0 : i64, tpu.core_type = #tpu.core_type<tc>, window_params = [{transform_indices = @transform_0, window_bounds = array<i64: 6, 252>}, {pipeline_mode = #tpu.pipeline_mode<synchronous>, transform_indices = @transform_1, window_bounds = array<i64: 252, 128>}, {pipeline_mode = #tpu.pipeline_mode<synchronous>, transform_indices = @transform_2, window_bounds = array<i64: 1, 128>}, {transform_indices = @transform_3, window_bounds = array<i64: 6, 128>}]} {
    %c0 = arith.constant 0 : index
    %c0_0 = arith.constant 0 : index
    %0 = vector.load %arg1[%c0, %c0_0] : memref<6x252xf32, #tpu.memory_space<vmem>>, vector<6x252xf32>
    %1 = arith.truncf %0 : vector<6x252xf32> to vector<6x252xbf16>
    %c0_1 = arith.constant 0 : index
    %c0_2 = arith.constant 0 : index
    %2 = vector.load %arg2[%c0_1, %c0_2] : memref<252x128xbf16, #tpu.memory_space<vmem>>, vector<252x128xbf16>
    %cst = arith.constant dense<0.000000e+00> : vector<6x128xf32>
    %3 = tpu.matmul %1, %2, %cst {dimension_numbers = #tpu.dot_dimension_numbers<[1], [0], [0], [1], [0, 0, 1, 1], [], []>} : vector<6x252xbf16>, vector<252x128xbf16>, vector<6x128xf32> -> vector<6x128xf32>
    %c0_3 = arith.constant 0 : index
    %c0_4 = arith.constant 0 : index
    %4 = vector.load %arg3[%c0_3, %c0_4] : memref<1x128xf32, #tpu.memory_space<vmem>>, vector<1x128xf32>
    %5 = vector.broadcast %4 : vector<1x128xf32> to vector<6x128xf32>
    %6 = arith.addf %3, %5 : vector<6x128xf32>
    %7 = math.tanh %6 : vector<6x128xf32>
    %c0_5 = arith.constant 0 : index
    %c0_6 = arith.constant 0 : index
    %8 = vector.load %arg4[%c0_5, %c0_6] : memref<6x128xf32, #tpu.memory_space<vmem>>, vector<6x128xf32>
    tpu.vector_store %arg4[%c0_5, %c0_6], %7 {strides = array<i32>} : memref<6x128xf32, #tpu.memory_space<vmem>>, vector<6x128xf32>,
    return
  }
  func.func @transform_0(%arg0: i32) -> (i32, i32) {
    %c0_i32 = arith.constant 0 : i32
    %c0_i32_0 = arith.constant 0 : i32
    return %arg0, %c0_i32 : i32, i32
  }
  func.func @transform_1(%arg0: i32) -> (i32, i32) {
    %c0_i32 = arith.constant 0 : i32
    %c0_i32_0 = arith.constant 0 : i32
    %c0_i32_1 = arith.constant 0 : i32
    return %c0_i32, %c0_i32_0 : i32, i32
  }
  func.func @transform_2(%arg0: i32) -> (i32, i32) {
    %c0_i32 = arith.constant 0 : i32
    %c0_i32_0 = arith.constant 0 : i32
    %c0_i32_1 = arith.constant 0 : i32
    return %c0_i32, %c0_i32_0 : i32, i32
  }
  func.func @transform_3(%arg0: i32) -> (i32, i32) {
    %c0_i32 = arith.constant 0 : i32
    %c0_i32_0 = arith.constant 0 : i32
    return %arg0, %c0_i32 : i32, i32
  }
}

</mosaic_0001>

<llo_original>
// kernel: tpu_custom_call.1
$region0: #{tpu_custom_call.1}
  #allocation0 [shape = 'u32[]', space=smem, size = 0x4, offset = 0x4, fixed_abs, tag = 'smem constant byte address 0x4 - core index']
  #allocation1 [shape = 'u32[144,128]{1,0:T(1,128)}', space=vmem, size = 0x12000, scoped, tag = 'internal scratch']
  %s0 = inlined_call_operand.hbm [shape: f32[6,252], index: 0, kind: input, shape index: {}]
  %s1 = inlined_call_operand.hbm [shape: bf16[252,128], index: 1, kind: input, shape index: {}]
  %s2 = inlined_call_operand.vmem [shape: f32[1,128], index: 2, kind: input, shape index: {}]
  %s3 = inlined_call_operand.hbm [shape: f32[6,128], index: 3, kind: output, shape index: {}]
  %s4 = sld [smem:[#allocation0]]
  $region30: #{tpu_custom_call.1} parent=0
    _
  %s6 = ssub.s32 1, %s4
  %s7 = scalar_select 0, %s6, %s4
  $region1: #{tpu_custom_call.1} parent=0
    #allocation2 [shape = 'u8[8192]{0}', space=vmem, size = 0x2000, scoped, tag = 'input window, operand 0, single buffered']
    #allocation3 [shape = 's32[1]{0}', space=sflag, size = 0x4, scoped, tag = 'scoped memory for tpu_custom_call.1']
    #allocation4 [shape = 's32[1]{0}', space=sflag, size = 0x4, scoped, tag = 'scoped memory for tpu_custom_call.1']
    #allocation5 [shape = 'u8[65536]{0}', space=vmem, size = 0x10000, scoped, tag = 'input window, operand 1, single buffered']
    #allocation6 [shape = 's32[1]{0}', space=sflag, size = 0x4, scoped, tag = 'scoped memory for tpu_custom_call.1']
    #allocation7 [shape = 'u8[4096]{0}', space=vmem, size = 0x1000, scoped, tag = 'output window, operand 0, single buffered']
    %8 = vsyncpa [#allocation3], 0
    %9 = vsyncpa [#allocation6], 0
    %10 = vsyncpa [#allocation4], 0
    // Predicated region
    $region2: #{tpu_custom_call.1} parent=1 // pred_check
      _
    $region3: #{tpu_custom_call.1} parent=1 // pred_check_branch
      %12 = sbr.rel (0) target = $region5
    $region4: #{tpu_custom_call.1} parent=1 // pred_region
      %s14 = ssub.s32 256, 256
      %15 = vsyncadd [#allocation3], %s14
      %s17 = sshll.u32 [#allocation2], 4
      %s18 = int_to_ptr.vmem [resolvable:$true] %s17
      %20 = dma.hbm_to_vmem [thread:$0]  %s0, 256, %s18, [#allocation3]
    $region5: #{tpu_custom_call.1} parent=1 // pred_fallthru
      _
    // Predicated region
    $region6: #{tpu_custom_call.1} parent=1 // pred_check
      _
    $region7: #{tpu_custom_call.1} parent=1 // pred_check_branch
      %22 = sbr.rel (0) target = $region9
    $region8: #{tpu_custom_call.1} parent=1 // pred_region
      %s24 = ssub.s32 2048, 2048
      %25 = vsyncadd [#allocation6], %s24
      %s26 = sshll.u32 [#allocation5], 4
      %s27 = int_to_ptr.vmem [resolvable:$true] %s26
      %32 = dma.hbm_to_vmem [thread:$0]  %s1, 2048, %s27, [#allocation6], 64, 64, 4
    $region9: #{tpu_custom_call.1} parent=1 // pred_fallthru
      _
    // Predicated region
    $region10: #{tpu_custom_call.1} parent=1 // pred_check
      _
    $region11: #{tpu_custom_call.1} parent=1 // pred_check_branch
      %34 = sbr.rel (0) target = $region13
    $region12: #{tpu_custom_call.1} parent=1 // pred_region
      _
    $region13: #{tpu_custom_call.1} parent=1 // pred_fallthru
      _
    // Predicated region
    $region14: #{tpu_custom_call.1} parent=1 // pred_check
      _
    $region15: #{tpu_custom_call.1} parent=1 // pred_check_branch
      %36 = sbr.rel (0) target = $region17
    $region16: #{tpu_custom_call.1} parent=1 // pred_region
      %37 = dma.done [#allocation3], 256
    $region17: #{tpu_custom_call.1} parent=1 // pred_fallthru
      _
    // Predicated region
    $region18: #{tpu_custom_call.1} parent=1 // pred_check
      _
    $region19: #{tpu_custom_call.1} parent=1 // pred_check_branch
      %39 = sbr.rel (0) target = $region21
    $region20: #{tpu_custom_call.1} parent=1 // pred_region
      %40 = dma.done [#allocation6], 2048
    $region21: #{tpu_custom_call.1} parent=1 // pred_fallthru
      _
    %v42 = vld [vmem:[#allocation2] sm:$0x3f]
    %v43 = vld [vmem:[#allocation2 + $0x8] sm:$0x3f]
    %v44 = vpack.c.bf16 %v42, %v42
    %v45 = vpack.c.bf16 %v43, %v43
    %v46 = vld [vmem:[#allocation5] sm:$0xf]
    %v47 = vld [vmem:[#allocation5 + $0x4] sm:$0xf]
    %v48 = vld [vmem:[#allocation5 + $0x8] sm:$0xf]
    %v49 = vld [vmem:[#allocation5 + $0xc] sm:$0xf]
    %v50 = vld [vmem:[#allocation5 + $0x10] sm:$0xf]
    %v51 = vld [vmem:[#allocation5 + $0x14] sm:$0xf]
    %v52 = vld [vmem:[#allocation5 + $0x18] sm:$0xf]
    %v53 = vld [vmem:[#allocation5 + $0x1c] sm:$0xf]
    %v54 = vld [vmem:[#allocation5 + $0x20] sm:$0xf]
    %v55 = vld [vmem:[#allocation5 + $0x24] sm:$0xf]
    %v56 = vld [vmem:[#allocation5 + $0x28] sm:$0xf]
    %v57 = vld [vmem:[#allocation5 + $0x2c] sm:$0xf]
    %v58 = vld [vmem:[#allocation5 + $0x30] sm:$0xf]
    %v59 = vld [vmem:[#allocation5 + $0x34] sm:$0xf]
    %v60 = vld [vmem:[#allocation5 + $0x38] sm:$0xf]
    %v61 = vld [vmem:[#allocation5 + $0x3c] sm:$0xf]
    %v62 = vld [vmem:[#allocation5 + $0x40] sm:$0xf]
    %v63 = vld [vmem:[#allocation5 + $0x44] sm:$0xf]
    %v64 = vld [vmem:[#allocation5 + $0x48] sm:$0xf]
    %v65 = vld [vmem:[#allocation5 + $0x4c] sm:$0xf]
    %v66 = vld [vmem:[#allocation5 + $0x50] sm:$0xf]
    %v67 = vld [vmem:[#allocation5 + $0x54] sm:$0xf]
    %v68 = vld [vmem:[#allocation5 + $0x58] sm:$0xf]
    %v69 = vld [vmem:[#allocation5 + $0x5c] sm:$0xf]
    %v70 = vld [vmem:[#allocation5 + $0x60] sm:$0xf]
    %v71 = vld [vmem:[#allocation5 + $0x64] sm:$0xf]
    %v72 = vld [vmem:[#allocation5 + $0x68] sm:$0xf]
    %v73 = vld [vmem:[#allocation5 + $0x6c] sm:$0xf]
    %v74 = vld [vmem:[#allocation5 + $0x70] sm:$0xf]
    %v75 = vld [vmem:[#allocation5 + $0x74] sm:$0xf]
    %v76 = vld [vmem:[#allocation5 + $0x78] sm:$0xf]
    %v77 = vld [vmem:[#allocation5 + $0x7c] sm:$0x3]
    %v78 = vld [vmem:[%s2] sm:$0x1]
    %v80 = vlaneseq
    %v81 = vshrl.u32 %v80, 7
    %v82 = vsub.s32 0, %v81
    %v83 = vrot.slane %v78, %v82
    %v117 = vunpack.c.l.b16 %v46
    %v118 = vunpack.c.l.b16 %v47
    %v119 = vunpack.c.l.b16 %v48
    %v120 = vunpack.c.l.b16 %v49
    %v121 = vunpack.c.l.b16 %v50
    %v122 = vunpack.c.l.b16 %v51
    %v123 = vunpack.c.l.b16 %v52
    %v124 = vunpack.c.l.b16 %v53
    %v125 = vunpack.c.l.b16 %v54
    %v126 = vunpack.c.l.b16 %v55
    %v127 = vunpack.c.l.b16 %v56
    %v128 = vunpack.c.l.b16 %v57
    %v129 = vunpack.c.l.b16 %v58
    %v130 = vunpack.c.l.b16 %v59
    %v131 = vunpack.c.l.b16 %v60
    %v132 = vunpack.c.l.b16 %v61
    %v133 = vunpack.c.l.b16 %v62
    %v134 = vunpack.c.l.b16 %v63
    %v135 = vunpack.c.l.b16 %v64
    %v136 = vunpack.c.l.b16 %v65
    %v137 = vunpack.c.l.b16 %v66
    %v138 = vunpack.c.l.b16 %v67
    %v139 = vunpack.c.l.b16 %v68
    %v140 = vunpack.c.l.b16 %v69
    %v141 = vunpack.c.l.b16 %v70
    %v142 = vunpack.c.l.b16 %v71
    %v143 = vunpack.c.l.b16 %v72
    %v144 = vunpack.c.l.b16 %v73
    %v145 = vunpack.c.l.b16 %v74
    %v146 = vunpack.c.l.b16 %v75
    %v147 = vunpack.c.l.b16 %v76
    %v148 = vunpack.c.l.b16 %v77
    %v149 = vpack.c.b16 %v118, %v117
    %v150 = vpack.c.b16 %v120, %v119
    %v151 = vpack.c.b16 %v122, %v121
    %v152 = vpack.c.b16 %v124, %v123
    %v153 = vpack.c.b16 %v126, %v125
    %v154 = vpack.c.b16 %v128, %v127
    %v155 = vpack.c.b16 %v130, %v129
    %v156 = vpack.c.b16 %v132, %v131
    %v157 = vpack.c.b16 %v134, %v133
    %v158 = vpack.c.b16 %v136, %v135
    %v159 = vpack.c.b16 %v138, %v137
    %v160 = vpack.c.b16 %v140, %v139
    %v161 = vpack.c.b16 %v142, %v141
    %v162 = vpack.c.b16 %v144, %v143
    %v163 = vpack.c.b16 %v146, %v145
    %v164 = vpack.c.b16 %v148, %v147
    %vm180 = vcmask 1014784
    %v182 = vsel %vm180, %v45, 0
    %vm184 = vcmask 1045504
    %v186 = vsel %vm184, %v164, 0
    %188 = vmatprep.subr.bf16.mxu0 0
    %189 = vmatpush1.bf16.msra.mxu0 %v156
    %190 = vmatprep.subr.bf16.mxu0 0
    %191 = vmatpush1.bf16.msra.mxu0 %v155
    %192 = vmatprep.subr.bf16.mxu0 0
    %193 = vmatpush1.bf16.msra.mxu0 %v154
    %194 = vmatprep.subr.bf16.mxu0 0
    %195 = vmatpush1.bf16.msra.mxu0 %v153
    %196 = vmatprep.subr.bf16.mxu0 0
    %197 = vmatpush1.bf16.msra.mxu0 %v152
    %198 = vmatprep.subr.bf16.mxu0 0
    %199 = vmatpush1.bf16.msra.mxu0 %v151
    %200 = vmatprep.subr.bf16.mxu0 0
    %201 = vmatpush1.bf16.msra.mxu0 %v150
    %202 = vmatprep.subr.bf16.mxu0 0
    %203 = vmatpush1.bf16.msra.mxu0 %v149
    %204 = vmatprep.subr.bf16.mxu0 0
    %205 = vmatpush2.bf16.msra.mxu0 %v186
    %206 = vmatprep.subr.bf16.mxu0 0
    %207 = vmatpush2.bf16.msra.mxu0 %v163
    %208 = vmatprep.subr.bf16.mxu0 0
    %209 = vmatpush2.bf16.msra.mxu0 %v162
    %210 = vmatprep.subr.bf16.mxu0 0
    %211 = vmatpush2.bf16.msra.mxu0 %v161
    %212 = vmatprep.subr.bf16.mxu0 0
    %213 = vmatpush2.bf16.msra.mxu0 %v160
    %214 = vmatprep.subr.bf16.mxu0 0
    %215 = vmatpush2.bf16.msra.mxu0 %v159
    %216 = vmatprep.subr.bf16.mxu0 0
    %217 = vmatpush2.bf16.msra.mxu0 %v158
    %218 = vmatprep.subr.bf16.mxu0 0
    %219 = vmatpush2.bf16.msra.mxu0 %v157
    %220 = vmatprep.mubr.bf16.mxu0 %v182
    %221 = vmatmul.mubr.bf16.gmra.mxu0 %v44
    %v222 = vpop.f32.mrf.mxu0
    %v223 = vadd.f32 %v83, %v222
    %v224 = vpop.f32.mrf.mxu0
    %v225 = vpop.f32.mrf.mxu0
    %v226 = vpop.f32.mrf.mxu0
    %227 = vdwg.mxu0
    %v228 = vtanh.pop %v223
    %229 = vst [vmem:[#allocation7] sm:$0x3f] %v228
    // Predicated region
    $region22: #{tpu_custom_call.1} parent=1 // pred_check
      _
    $region23: #{tpu_custom_call.1} parent=1 // pred_check_branch
      %231 = sbr.rel (0) target = $region25
    $region24: #{tpu_custom_call.1} parent=1 // pred_region
      %s233 = ssub.s32 128, 128
      %234 = vsyncadd [#allocation4], %s233
      %s236 = sshll.u32 [#allocation7], 4
      %s237 = int_to_ptr.vmem [resolvable:$true] %s236
      %239 = dma.vmem_to_hbm [thread:$0]  %s237, 128, %s3, [#allocation4]
    $region25: #{tpu_custom_call.1} parent=1 // pred_fallthru
      _
    // Predicated region
    $region26: #{tpu_custom_call.1} parent=1 // pred_check
      _
    $region27: #{tpu_custom_call.1} parent=1 // pred_check_branch
      %241 = sbr.rel (0) target = $region29
    $region28: #{tpu_custom_call.1} parent=1 // pred_region
      %242 = dma.done [#allocation4], 128
    $region29: #{tpu_custom_call.1} parent=1 // pred_fallthru
      _
    %243 = vsyncpa [#allocation3], 1
    %244 = vsyncpa [#allocation6], 1
    %245 = vsyncpa [#allocation4], 1

</llo_original>
